<compile_context>
chip_gen: v7x
topology: tpu7x:2x2x1
jax: 0.10.0
libtpu: 0.0.40
codegen_flags: <defaults>
</compile_context>

<pallas_src>
import functools

import jax
import jax.numpy as jnp
from jax.experimental import pallas as pl
from jax.experimental.pallas import tpu as pltpu


def _focal_loss_kernel(logits_ref, labels_ref, sum_ref, cnt_ref, *,
                       gamma, ignore_lb, num_cols, tile_cols, needs_tail_mask):
    # logits_ref: (1, C, T)  labels_ref: (1, 1, T)
    x = logits_ref[...].astype(jnp.float32)           # (1, C, T)
    labels = labels_ref[...].astype(jnp.int32)        # (1, 1, T)

    # softmax statistics over the class (sublane) axis -- 2 XLU reductions
    m = jnp.max(x, axis=1, keepdims=True)              # (1, 1, T)
    e = jnp.exp(x - m)                                  # (1, C, T)  EUP
    s = jnp.sum(e, axis=1, keepdims=True)               # (1, 1, T)

    # gather logit at the label class via select + class-axis sum (1 XLU reduce,
    # no f32 cast / extra (C,T) multiply)
    cls = jax.lax.broadcasted_iota(jnp.int32, x.shape, 1)           # (1, C, T)
    x_lab = jnp.sum(jnp.where(cls == labels, x, 0.0),
                    axis=1, keepdims=True)                          # (1, 1, T)

    logp_lab = (x_lab - m) - jnp.log(s)                # log_softmax at label
    # p_label = exp(logp_lab): replaces the e_lab one-hot gather + divide.
    # (expm1 would be marginally more precise for p ~= 1, but the contribution
    #  of those pixels to the loss is ~0; plain exp keeps the lowering simple.)
    one_minus_p = 1.0 - jnp.exp(logp_lab)

    # (1 - p) ** gamma : strength-reduce to multiplies for small integer gamma
    g = float(gamma)
    if g.is_integer() and 0 <= g <= 8:
        factor = jnp.ones_like(one_minus_p)
        for _ in range(int(g)):
            factor = factor * one_minus_p
    else:
        factor = jnp.power(one_minus_p, g)

    picked = factor * logp_lab                          # (1, 1, T)

    # validity mask: ignore_index always; ragged tail only when it can exist
    valid = labels != ignore_lb
    if needs_tail_mask:
        j = pl.program_id(1)
        col = jax.lax.broadcasted_iota(jnp.int32, labels.shape, 2) + j * tile_cols
        valid = valid & (col < num_cols)

    picked = jnp.where(valid, picked, 0.0)              # kills tail NaN/Inf too
    psum = jnp.sum(picked)
    pcnt = jnp.sum(valid.astype(jnp.float32))

    # per-grid-step partials, broadcast into a lane-dense (8,128) tile
    sum_ref[...] = jnp.full(sum_ref.shape, psum, dtype=jnp.float32)
    cnt_ref[...] = jnp.full(cnt_ref.shape, pcnt, dtype=jnp.float32)


def softmax_focal_loss(logits, labels, gamma=2.0, ignore_lb=255, tile_cols=None):
    """logits: (N, C, H, W) float32/bfloat16, labels: (N, H, W) int.

    Returns the scalar focal loss (mean over pixels whose label != ignore_lb).
    bf16 logits are streamed as-is (half the HBM bytes); math is f32 in-kernel.
    """
    N, C, H, W = logits.shape
    HW = H * W
    itemsize = jnp.dtype(logits.dtype).itemsize

    # Free reshapes: class dim stays on the sublane axis, pixels on lanes.
    x = logits.reshape(N, C, HW)
    lab = labels.reshape(N, 1, HW)
    # Ship labels narrow when they fit: labels are ~1/C of logits traffic at
    # int32; uint8 cuts that 4x (biggest relative win on v5e / small C).
    if C <= 256 and 0 <= int(ignore_lb) <= 255:
        lab = lab.astype(jnp.uint8)
    else:
        lab = lab.astype(jnp.int32)
    label_itemsize = jnp.dtype(lab.dtype).itemsize

    if tile_cols is None:
        # target ~4 MiB of logits per block (amortizes the ~0.35 us/step
        # overhead, >=85% of HBM roofline), lane-aligned, capped at 64K lanes.
        t = (4 << 20) // (C * itemsize)
        tile_cols = max(128, min(65536, (t // 128) * 128))
    if tile_cols >= HW:
        tile_cols = HW                     # single full-extent block per batch
    else:
        assert tile_cols % 128 == 0, "tile_cols must be a multiple of 128"
    num_tiles = -(-HW // tile_cols)

    # v7x has 2 TensorCores: make sure the parallel grid has >= 2 programs.
    if N * num_tiles < 2 and HW >= 256:
        tile_cols = (((HW + 1) // 2 + 127) // 128) * 128
        num_tiles = -(-HW // tile_cols)

    needs_tail_mask = (HW % tile_cols) != 0

    kernel = functools.partial(
        _focal_loss_kernel,
        gamma=float(gamma), ignore_lb=int(ignore_lb),
        num_cols=HW, tile_cols=tile_cols, needs_tail_mask=needs_tail_mask)

    cost = pl.CostEstimate(
        flops=int(6 * N * C * HW),
        transcendentals=int(N * HW * (C + 2)),
        bytes_accessed=int(N * HW * (C * itemsize + label_itemsize)
                           + 2 * N * num_tiles * 8 * 128 * 4),
    )

    sum_out, cnt_out = pl.pallas_call(
        kernel,
        out_shape=(
            jax.ShapeDtypeStruct((N, num_tiles, 8, 128), jnp.float32),
            jax.ShapeDtypeStruct((N, num_tiles, 8, 128), jnp.float32),
        ),
        grid=(N, num_tiles),
        in_specs=[
            pl.BlockSpec((1, C, tile_cols), lambda n, j: (n, 0, j)),
            pl.BlockSpec((1, 1, tile_cols), lambda n, j: (n, 0, j)),
        ],
        out_specs=(
            pl.BlockSpec((1, 1, 8, 128), lambda n, j: (n, j, 0, 0)),
            pl.BlockSpec((1, 1, 8, 128), lambda n, j: (n, j, 0, 0)),
        ),
        compiler_params=pltpu.CompilerParams(
            dimension_semantics=("parallel", "parallel"),
            vmem_limit_bytes=32 * 1024 * 1024),
        cost_estimate=cost,
    )(x, lab)

    total = jnp.sum(sum_out[:, :, 0, 0])
    count = jnp.sum(cnt_out[:, :, 0, 0])
    # NLLLoss(reduction='mean'): -sum(picked) / num_valid
    # (NaN if every pixel is ignored, matching PyTorch mean semantics.)
    return -(total / count)


def _reference_loss(logits, labels, gamma=2.0, ignore_lb=255):
    x = logits.astype(jnp.float32)
    logp = jax.nn.log_softmax(x, axis=1)
    p = jax.nn.softmax(x, axis=1)
    fl = jnp.power(1.0 - p, gamma) * logp                      # (N, C, H, W)
    lab = labels.astype(jnp.int32)
    valid = lab != ignore_lb
    safe_lab = jnp.where(valid, lab, 0)
    picked = jnp.take_along_axis(fl, safe_lab[:, None, :, :], axis=1)[:, 0]
    picked = jnp.where(valid, picked, 0.0)
    return -(jnp.sum(picked) / jnp.sum(valid.astype(jnp.float32)))


if __name__ == "__main__":
    key = jax.random.PRNGKey(0)
    k1, k2, k3 = jax.random.split(key, 3)

    N, C, H, W = 2, 4, 16, 16
    gamma = 2.0
    ignore_lb = 255

    logits = jax.random.normal(k1, (N, C, H, W), dtype=jnp.float32)
    labels = jax.random.randint(k2, (N, H, W), 0, C, dtype=jnp.int32)
    ignore_mask = jax.random.uniform(k3, (N, H, W)) < 0.1
    labels = jnp.where(ignore_mask, ignore_lb, labels)

    # 1) default tiling, f32 logits
    loss = softmax_focal_loss(logits, labels, gamma=gamma, ignore_lb=ignore_lb)
    loss = jax.block_until_ready(loss)
    ref = _reference_loss(logits, labels, gamma=gamma, ignore_lb=ignore_lb)
    assert jnp.allclose(loss, ref, rtol=1e-5, atol=1e-5), (loss, ref)

    # 2) multi-tile + ragged-tail masking path (HW=300, tile=128)
    H2, W2 = 15, 20
    logits2 = jax.random.normal(k1, (N, C, H2, W2), dtype=jnp.float32)
    labels2 = jax.random.randint(k2, (N, H2, W2), 0, C, dtype=jnp.int32)
    loss2 = softmax_focal_loss(logits2, labels2, gamma=gamma,
                               ignore_lb=ignore_lb, tile_cols=128)
    loss2 = jax.block_until_ready(loss2)
    ref2 = _reference_loss(logits2, labels2, gamma=gamma, ignore_lb=ignore_lb)
    assert jnp.allclose(loss2, ref2, rtol=1e-5, atol=1e-5), (loss2, ref2)

    # 3) N=1: exercises the 2-program split (keeps both v7x TensorCores busy)
    logits3 = logits[:1]
    labels3 = labels[:1]
    loss3 = softmax_focal_loss(logits3, labels3, gamma=gamma, ignore_lb=ignore_lb)
    loss3 = jax.block_until_ready(loss3)
    ref3 = _reference_loss(logits3, labels3, gamma=gamma, ignore_lb=ignore_lb)
    assert jnp.allclose(loss3, ref3, rtol=1e-5, atol=1e-5), (loss3, ref3)

    # 4) bf16 logits streamed as-is (kernel upcasts to f32 internally)
    logits_bf16 = logits.astype(jnp.bfloat16)
    loss4 = softmax_focal_loss(logits_bf16, labels, gamma=gamma,
                               ignore_lb=ignore_lb)
    loss4 = jax.block_until_ready(loss4)
    ref4 = _reference_loss(logits_bf16, labels, gamma=gamma, ignore_lb=ignore_lb)
    assert jnp.allclose(loss4, ref4, rtol=1e-5, atol=1e-5), (loss4, ref4)

    print("KERNEL_OK")
</pallas_src>

<mosaic_0001>
module attributes {stable_mosaic.version = 11 : i64} {
  func.func @_focal_loss_kernel(%arg0: i32, %arg1: i32, %arg2: memref<1x4x256xf32, #tpu.memory_space<vmem>>, %arg3: memref<1x1x256xi8, #tpu.memory_space<vmem>>, %arg4: memref<1x1x8x128xf32, #tpu.memory_space<vmem>>, %arg5: memref<1x1x8x128xf32, #tpu.memory_space<vmem>>) attributes {dimension_semantics = [#tpu.dimension_semantics<parallel>, #tpu.dimension_semantics<parallel>], iteration_bounds = array<i64: 2, 1>, scalar_prefetch = 0 : i64, scratch_operands = 0 : i64, tpu.core_type = #tpu.core_type<tc>, window_params = [{transform_indices = @transform_0, window_bounds = array<i64: 1, 4, 256>}, {transform_indices = @transform_1, window_bounds = array<i64: 1, 1, 256>}, {transform_indices = @transform_2, window_bounds = array<i64: 1, 1, 8, 128>}, {transform_indices = @transform_3, window_bounds = array<i64: 1, 1, 8, 128>}]} {
    %c0 = arith.constant 0 : index
    %c0_0 = arith.constant 0 : index
    %c0_1 = arith.constant 0 : index
    %0 = vector.load %arg2[%c0, %c0_0, %c0_1] : memref<1x4x256xf32, #tpu.memory_space<vmem>>, vector<1x4x256xf32>
    %c0_2 = arith.constant 0 : index
    %c0_3 = arith.constant 0 : index
    %c0_4 = arith.constant 0 : index
    %1 = vector.load %arg3[%c0_2, %c0_3, %c0_4] : memref<1x1x256xi8, #tpu.memory_space<vmem>>, vector<1x1x256xi8>
    %2 = arith.extui %1 : vector<1x1x256xi8> to vector<1x1x256xi32>
    %cst = arith.constant dense<0xFF800000> : vector<1x256xf32>
    %3 = vector.multi_reduction <maximumf>, %0, %cst [1] : vector<1x4x256xf32> to vector<1x256xf32>
    %4 = vector.shape_cast %3 : vector<1x256xf32> to vector<1x1x256xf32>
    %5 = vector.broadcast %4 : vector<1x1x256xf32> to vector<1x4x256xf32>
    %6 = arith.subf %0, %5 : vector<1x4x256xf32>
    %7 = math.exp %6 : vector<1x4x256xf32>
    %cst_5 = arith.constant dense<0.000000e+00> : vector<1x256xf32>
    %8 = vector.multi_reduction <add>, %7, %cst_5 [1] : vector<1x4x256xf32> to vector<1x256xf32>
    %9 = vector.shape_cast %8 : vector<1x256xf32> to vector<1x1x256xf32>
    %10 = tpu.iota {dimensions = array<i32: 1>} : vector<1x4x256xi32>
    %11 = vector.broadcast %2 : vector<1x1x256xi32> to vector<1x4x256xi32>
    %12 = arith.cmpi eq, %10, %11 : vector<1x4x256xi32>
    %cst_6 = arith.constant 0.000000e+00 : f32
    %13 = vector.broadcast %cst_6 : f32 to vector<1x4x256xf32>
    %14 = arith.select %12, %0, %13 : vector<1x4x256xi1>, vector<1x4x256xf32>
    %cst_7 = arith.constant dense<0.000000e+00> : vector<1x256xf32>
    %15 = vector.multi_reduction <add>, %14, %cst_7 [1] : vector<1x4x256xf32> to vector<1x256xf32>
    %16 = vector.shape_cast %15 : vector<1x256xf32> to vector<1x1x256xf32>
    %17 = arith.subf %16, %4 : vector<1x1x256xf32>
    %18 = math.log %9 : vector<1x1x256xf32>
    %19 = arith.subf %17, %18 : vector<1x1x256xf32>
    %20 = math.exp %19 : vector<1x1x256xf32>
    %cst_8 = arith.constant 1.000000e+00 : f32
    %21 = vector.broadcast %cst_8 : f32 to vector<1x1x256xf32>
    %22 = arith.subf %21, %20 : vector<1x1x256xf32>
    %cst_9 = arith.constant 1.000000e+00 : f32
    %23 = vector.broadcast %cst_9 : f32 to vector<1x1x256xf32>
    %24 = arith.mulf %23, %22 : vector<1x1x256xf32>
    %25 = arith.mulf %24, %22 : vector<1x1x256xf32>
    %26 = arith.mulf %25, %19 : vector<1x1x256xf32>
    %c255_i32 = arith.constant 255 : i32
    %27 = vector.broadcast %c255_i32 : i32 to vector<1x1x256xi32>
    %28 = arith.cmpi ne, %2, %27 : vector<1x1x256xi32>
    %cst_10 = arith.constant 0.000000e+00 : f32
    %29 = vector.broadcast %cst_10 : f32 to vector<1x1x256xf32>
    %30 = arith.select %28, %26, %29 : vector<1x1x256xi1>, vector<1x1x256xf32>
    %31 = vector.shape_cast %30 : vector<1x1x256xf32> to vector<1x1x1x256xf32>
    %cst_11 = arith.constant dense<0.000000e+00> : vector<1xf32>
    %32 = vector.multi_reduction <add>, %31, %cst_11 [1, 2, 3] : vector<1x1x1x256xf32> to vector<1xf32>
    %33 = vector.shape_cast %32 : vector<1xf32> to vector<1x1x1x1xf32>
    %34 = vector.extract %33[0, 0, 0, 0] : f32 from vector<1x1x1x1xf32>
    %35 = arith.extui %28 : vector<1x1x256xi1> to vector<1x1x256xi32>
    %36 = arith.sitofp %35 : vector<1x1x256xi32> to vector<1x1x256xf32>
    %37 = vector.shape_cast %36 : vector<1x1x256xf32> to vector<1x1x1x256xf32>
    %cst_12 = arith.constant dense<0.000000e+00> : vector<1xf32>
    %38 = vector.multi_reduction <add>, %37, %cst_12 [1, 2, 3] : vector<1x1x1x256xf32> to vector<1xf32>
    %39 = vector.shape_cast %38 : vector<1xf32> to vector<1x1x1x1xf32>
    %40 = vector.extract %39[0, 0, 0, 0] : f32 from vector<1x1x1x1xf32>
    %41 = vector.broadcast %34 : f32 to vector<1x1x8x128xf32>
    %c0_13 = arith.constant 0 : index
    %c0_14 = arith.constant 0 : index
    %c0_15 = arith.constant 0 : index
    %c0_16 = arith.constant 0 : index
    %42 = vector.load %arg4[%c0_13, %c0_14, %c0_15, %c0_16] : memref<1x1x8x128xf32, #tpu.memory_space<vmem>>, vector<1x1x8x128xf32>
    tpu.vector_store %arg4[%c0_13, %c0_14, %c0_15, %c0_16], %41 {strides = array<i32>} : memref<1x1x8x128xf32, #tpu.memory_space<vmem>>, vector<1x1x8x128xf32>,
    %43 = vector.broadcast %40 : f32 to vector<1x1x8x128xf32>
    %c0_17 = arith.constant 0 : index
    %c0_18 = arith.constant 0 : index
    %c0_19 = arith.constant 0 : index
    %c0_20 = arith.constant 0 : index
    %44 = vector.load %arg5[%c0_17, %c0_18, %c0_19, %c0_20] : memref<1x1x8x128xf32, #tpu.memory_space<vmem>>, vector<1x1x8x128xf32>
    tpu.vector_store %arg5[%c0_17, %c0_18, %c0_19, %c0_20], %43 {strides = array<i32>} : memref<1x1x8x128xf32, #tpu.memory_space<vmem>>, vector<1x1x8x128xf32>,
    return
  }
  func.func @transform_0(%arg0: i32, %arg1: i32) -> (i32, i32, i32) {
    %c0_i32 = arith.constant 0 : i32
    %c0_i32_0 = arith.constant 0 : i32
    return %arg0, %c0_i32, %arg1 : i32, i32, i32
  }
  func.func @transform_1(%arg0: i32, %arg1: i32) -> (i32, i32, i32) {
    %c0_i32 = arith.constant 0 : i32
    %c0_i32_0 = arith.constant 0 : i32
    return %arg0, %c0_i32, %arg1 : i32, i32, i32
  }
  func.func @transform_2(%arg0: i32, %arg1: i32) -> (i32, i32, i32, i32) {
    %c0_i32 = arith.constant 0 : i32
    %c0_i32_0 = arith.constant 0 : i32
    %c0_i32_1 = arith.constant 0 : i32
    return %arg0, %arg1, %c0_i32, %c0_i32_0 : i32, i32, i32, i32
  }
  func.func @transform_3(%arg0: i32, %arg1: i32) -> (i32, i32, i32, i32) {
    %c0_i32 = arith.constant 0 : i32
    %c0_i32_0 = arith.constant 0 : i32
    %c0_i32_1 = arith.constant 0 : i32
    return %arg0, %arg1, %c0_i32, %c0_i32_0 : i32, i32, i32, i32
  }
}

</mosaic_0001>

<llo_original>
// kernel: tpu_custom_call.1
$region0: #{tpu_custom_call.1}
  #allocation0 [shape = 'u32[]', space=smem, size = 0x4, offset = 0x4, fixed_abs, tag = 'smem constant byte address 0x4 - core index']
  #allocation1 [shape = 'u32[144,128]{1,0:T(1,128)}', space=vmem, size = 0x12000, scoped, tag = 'internal scratch']
  %s0 = inlined_call_operand.hbm [shape: f32[2,4,256], index: 0, kind: input, shape index: {}]
  %s1 = inlined_call_operand.vmem [shape: u8[2,1,256], index: 1, kind: input, shape index: {}]
  %s2 = inlined_call_operand.hbm [shape: f32[2,1,8,128], index: 2, kind: output, shape index: {0}]
  %s3 = inlined_call_operand.hbm [shape: f32[2,1,8,128], index: 3, kind: output, shape index: {1}]
  %4 = xla_tuple %s2, %s3
  %s5 = sld [smem:[#allocation0]]
  $region53: #{tpu_custom_call.1} parent=0
    _
  %s7 = ssub.s32 1, %s5
  %s8 = scalar_select 0, %s7, %s5
  $region1: #{tpu_custom_call.1} parent=0
    #allocation2 [shape = 'u8[8192]{0}', space=vmem, size = 0x2000, scoped, tag = 'input window, operand 0']
    #allocation3 [shape = 's32[2]{0}', space=sflag, size = 0x8, scoped, tag = 'scoped memory for tpu_custom_call.1']
    #allocation4 [shape = 's32[2]{0}', space=sflag, size = 0x8, scoped, tag = 'scoped memory for tpu_custom_call.1']
    #allocation5 [shape = 'u8[8192]{0}', space=vmem, size = 0x2000, scoped, tag = 'output window, operand 0']
    #allocation6 [shape = 'u8[8192]{0}', space=vmem, size = 0x2000, scoped, tag = 'output window, operand 1']
    #allocation7 [shape = 's32[2]{0}', space=sflag, size = 0x8, scoped, tag = 'scoped memory for tpu_custom_call.1']
    %9 = vsyncpa [#allocation3], 0
    %s10 = scalar_lea.sflag [#allocation3], 1
    %11 = vsyncpa %s10, 0
    %12 = vsyncpa [#allocation4], 0
    %s13 = scalar_lea.sflag [#allocation4], 1
    %14 = vsyncpa %s13, 0
    %15 = vsyncpa [#allocation7], 0
    %s16 = scalar_lea.sflag [#allocation7], 1
    %17 = vsyncpa %s16, 0
    loop: start=0, step=1, limit=4
    $region2: #{tpu_custom_call.1} parent=1 // loop_pre_header
      _
    $region3: #{tpu_custom_call.1} parent=1 // loop_header
      %s19 = sphi 0, %s23
      %p20 = scmp.ge.s32.totalorder %s19, 4
      %s26 = sphi 0, %s38
      %s27 = sphi 0, %s34
      %s28 = sphi 0, %s26
      %s29 = sphi 0, %s27
      %s30 = sphi 0, %s28
      %s31 = sphi 0, %s29
      %s43 = sphi 0, %s45
      %s46 = sphi 0, %s43
      %s47 = sphi 0, %s46
      %s63 = sphi 0, %s47
      %s71 = sphi 0, %s73
      %s74 = sphi 0, %s71
      %s75 = sphi 0, %s74
      %s91 = sphi 0, %s75
      %s99 = sphi 0, %s101
      %s102 = sphi 0, %s99
      %s103 = sphi 0, %s102
      %s119 = sphi 0, %s103
      %s127 = sphi 0, %s129
      %s130 = sphi 0, %s127
      %s131 = sphi 0, %s130
      %s147 = sphi 0, %s131
    $region4: #{tpu_custom_call.1} parent=1 // loop_header_branch
      %22 = sbr.rel (%p20) target = $region8
    $region5: #{tpu_custom_call.1} parent=1 // loop_body
      %s24 = ssub.s32 %s19, 1
      %s25 = ssub.s32 %s19, 2
      %s32 = sadd.s32 1, %s27
      %p33 = scmp.ge.s32.totalorder %s32, 1
      %s34 = scalar_select %p33, 0, %s32
      %s35 = sadd.s32 1, %s26
      %s36 = scalar_select %p33, %s35, %s26
      %p37 = scmp.ge.s32.totalorder %s36, 2
      %s38 = scalar_select %p37, 0, %s36
      %s39 = ssub.s32 %s26, %s38
      %s40 = ssub.s32 %s27, %s34
      %s41 = sor.u32 %s39, %s40
      %p42 = scmp.eq.s32.totalorder %s41, 0
      %s44 = sadd.s32 %s43, 1
      %s45 = scalar_select %p42, %s43, %s44
      %p48 = pneg %p42
      %p49 = scmp.eq.s32.totalorder %s19, 1
      %p50 = por %p48, %p49
      %p51 = scmp.ne.s32.totalorder %s43, %s46
      %p52 = scmp.eq.s32.totalorder %s19, 0
      %p53 = por %p51, %p52
      %p54 = scmp.ne.s32.totalorder %s43, %s46
      %p55 = scmp.eq.s32.totalorder %s24, 1
      %p56 = por %p54, %p55
      %p57 = scmp.ne.s32.totalorder %s46, %s47
      %p58 = scmp.eq.s32.totalorder %s24, 0
      %p59 = por %p57, %p58
      %p60 = scmp.ne.s32.totalorder %s46, %s47
      %p61 = scmp.eq.s32.totalorder %s25, 1
      %p62 = por %p60, %p61
      %p64 = scmp.ne.s32.totalorder %s47, %s63
      %p65 = scmp.eq.s32.totalorder %s25, 0
      %p66 = por %p64, %p65
      %s67 = ssub.s32 %s26, %s38
      %s68 = ssub.s32 %s27, %s34
      %s69 = sor.u32 %s67, %s68
      %p70 = scmp.eq.s32.totalorder %s69, 0
      %s72 = sadd.s32 %s71, 1
      %s73 = scalar_select %p70, %s71, %s72
      %p76 = pneg %p70
      %p77 = scmp.eq.s32.totalorder %s19, 1
      %p78 = por %p76, %p77
      %p79 = scmp.ne.s32.totalorder %s71, %s74
      %p80 = scmp.eq.s32.totalorder %s19, 0
      %p81 = por %p79, %p80
      %p82 = scmp.ne.s32.totalorder %s71, %s74
      %p83 = scmp.eq.s32.totalorder %s24, 1
      %p84 = por %p82, %p83
      %p85 = scmp.ne.s32.totalorder %s74, %s75
      %p86 = scmp.eq.s32.totalorder %s24, 0
      %p87 = por %p85, %p86
      %p88 = scmp.ne.s32.totalorder %s74, %s75
      %p89 = scmp.eq.s32.totalorder %s25, 1
      %p90 = por %p88, %p89
      %p92 = scmp.ne.s32.totalorder %s75, %s91
      %p93 = scmp.eq.s32.totalorder %s25, 0
      %p94 = por %p92, %p93
      %s95 = ssub.s32 %s26, %s38
      %s96 = ssub.s32 %s27, %s34
      %s97 = sor.u32 %s95, %s96
      %p98 = scmp.eq.s32.totalorder %s97, 0
      %s100 = sadd.s32 %s99, 1
      %s101 = scalar_select %p98, %s99, %s100
      %p104 = pneg %p98
      %p105 = scmp.eq.s32.totalorder %s19, 1
      %p106 = por %p104, %p105
      %p107 = scmp.ne.s32.totalorder %s99, %s102
      %p108 = scmp.eq.s32.totalorder %s19, 0
      %p109 = por %p107, %p108
      %p110 = scmp.ne.s32.totalorder %s99, %s102
      %p111 = scmp.eq.s32.totalorder %s24, 1
      %p112 = por %p110, %p111
      %p113 = scmp.ne.s32.totalorder %s102, %s103
      %p114 = scmp.eq.s32.totalorder %s24, 0
      %p115 = por %p113, %p114
      %p116 = scmp.ne.s32.totalorder %s102, %s103
      %p117 = scmp.eq.s32.totalorder %s25, 1
      %p118 = por %p116, %p117
      %p120 = scmp.ne.s32.totalorder %s103, %s119
      %p121 = scmp.eq.s32.totalorder %s25, 0
      %p122 = por %p120, %p121
      %s123 = ssub.s32 %s26, %s38
      %s124 = ssub.s32 %s27, %s34
      %s125 = sor.u32 %s123, %s124
      %p126 = scmp.eq.s32.totalorder %s125, 0
      %s128 = sadd.s32 %s127, 1
      %s129 = scalar_select %p126, %s127, %s128
      %p132 = pneg %p126
      %p133 = scmp.eq.s32.totalorder %s19, 1
      %p134 = por %p132, %p133
      %p135 = scmp.ne.s32.totalorder %s127, %s130
      %p136 = scmp.eq.s32.totalorder %s19, 0
      %p137 = por %p135, %p136
      %p138 = scmp.ne.s32.totalorder %s127, %s130
      %p139 = scmp.eq.s32.totalorder %s24, 1
      %p140 = por %p138, %p139
      %p141 = scmp.ne.s32.totalorder %s130, %s131
      %p142 = scmp.eq.s32.totalorder %s24, 0
      %p143 = por %p141, %p142
      %p144 = scmp.ne.s32.totalorder %s130, %s131
      %p145 = scmp.eq.s32.totalorder %s25, 1
      %p146 = por %p144, %p145
      %p148 = scmp.ne.s32.totalorder %s131, %s147
      %p149 = scmp.eq.s32.totalorder %s25, 0
      %p150 = por %p148, %p149
      %p151 = scmp.le.s32.totalorder 1, %s19
      %p152 = scmp.lt.s32.totalorder %s19, 3
      %p153 = pnand %p151, %p152
      %p154 = pneg %p153
      // Predicated region
      $region9: #{tpu_custom_call.1} parent=5 // pred_check
        _
      $region10: #{tpu_custom_call.1} parent=5 // pred_check_branch
        %156 = sbr.rel (%p153) target = $region12
      $region11: #{tpu_custom_call.1} parent=5 // pred_region
        %s157 = ssub.s32 %s19, 1
      $region12: #{tpu_custom_call.1} parent=5 // pred_fallthru
        _
      %p158 = scmp.lt.s32.totalorder %s19, 2
      // Predicated region
      $region13: #{tpu_custom_call.1} parent=5 // pred_check
        %p159 = pneg %p158
      $region14: #{tpu_custom_call.1} parent=5 // pred_check_branch
        %161 = sbr.rel (%p159) target = $region16
      $region15: #{tpu_custom_call.1} parent=5 // pred_region
        // Predicated region
        $region17: #{tpu_custom_call.1} parent=15 // pred_check
          %p162 = pneg %p53
        $region18: #{tpu_custom_call.1} parent=15 // pred_check_branch
          %164 = sbr.rel (%p162) target = $region20
        $region19: #{tpu_custom_call.1} parent=15 // pred_region
          %s165 = sand.u32 %s43, 1
          %s166 = scalar_lea.sflag [#allocation3], %s165
          %s167 = sand.u32 %s43, 1
          %s168 = smul.addr %s167, 8
          %s169 = scalar_lea.vmem [#allocation2], %s168
          %s170 = smul.u32 2, %s27
          %s172 = ssub.s32 128, 128
          %173 = vsyncadd %s166, %s172
          %s174 = smul.addr %s26, 2
          %s175 = sadd.s32 %s170, %s174
          %s176 = smul.addr %s175, 64
          %s177 = scalar_lea.hbm %s0, %s176
          %s179 = sshll.u32 %s169, 4
          %s180 = int_to_ptr.vmem [resolvable:$true] %s179
          %182 = dma.hbm_to_vmem [thread:$0]  %s177, 128, %s180, %s166
        $region20: #{tpu_custom_call.1} parent=15 // pred_fallthru
          _
        // Predicated region
        $region21: #{tpu_custom_call.1} parent=15 // pred_check
          %p183 = pneg %p81
        $region22: #{tpu_custom_call.1} parent=15 // pred_check_branch
          %185 = sbr.rel (%p183) target = $region24
        $region23: #{tpu_custom_call.1} parent=15 // pred_region
          %s186 = smul.u32 2, %s27
          %p187 = scmp.lt.s32.totalorder %s26, 1
          %s188 = scalar_select %p187, %s26, 1
          %p189 = scmp.lt.s32.totalorder %s186, 1
          %s190 = scalar_select %p189, %s186, 1
          %s191 = smul.addr %s188, 2
          %s192 = sadd.s32 %s190, %s191
          %s193 = scalar_lea.vmem %s1, %s192
          %s194 = smul.u32 2, %s27
        $region24: #{tpu_custom_call.1} parent=15 // pred_fallthru
          _
      $region16: #{tpu_custom_call.1} parent=5 // pred_fallthru
        _
      %p195 = scmp.le.s32.totalorder 1, %s19
      %p196 = scmp.lt.s32.totalorder %s19, 3
      %p197 = pnand %p195, %p196
      %p198 = pneg %p197
      // Predicated region
      $region25: #{tpu_custom_call.1} parent=5 // pred_check
        _
      $region26: #{tpu_custom_call.1} parent=5 // pred_check_branch
        %200 = sbr.rel (%p197) target = $region28
      $region27: #{tpu_custom_call.1} parent=5 // pred_region
        %s201 = ssub.s32 %s19, 1
        %s202 = sand.u32 %s46, 1
        %s203 = scalar_lea.sflag [#allocation3], %s202
        %s204 = sand.u32 %s46, 1
        %s205 = smul.addr %s204, 8
        %s206 = scalar_lea.vmem [#allocation2], %s205
        // Predicated region
        $region29: #{tpu_custom_call.1} parent=27 // pred_check
          %p207 = pneg %p59
        $region30: #{tpu_custom_call.1} parent=27 // pred_check_branch
          %209 = sbr.rel (%p207) target = $region32
        $region31: #{tpu_custom_call.1} parent=27 // pred_region
          %210 = dma.done %s203, 128
        $region32: #{tpu_custom_call.1} parent=27 // pred_fallthru
          _
        %s211 = sand.u32 %s46, 1
        %s212 = scalar_lea.sflag [#allocation3], %s211
        %s213 = sand.u32 %s46, 1
        %s214 = smul.addr %s213, 8
        %s215 = scalar_lea.vmem [#allocation2], %s214
        %p216 = pneg %p59
        %p217 = pneg %p56
        %s218 = smul.u32 2, %s29
        %p219 = scmp.lt.s32.totalorder %s28, 1
        %s220 = scalar_select %p219, %s28, 1
        %p221 = scmp.lt.s32.totalorder %s218, 1
        %s222 = scalar_select %p221, %s218, 1
        %s223 = smul.addr %s220, 2
        %s224 = sadd.s32 %s222, %s223
        %s225 = scalar_lea.vmem %s1, %s224
        %p226 = pneg %p87
        %p227 = pneg %p84
        %p228 = pneg %p115
        %p229 = pneg %p112
        %s230 = sand.u32 %s102, 1
        %s231 = scalar_lea.sflag [#allocation4], %s230
        %s232 = sand.u32 %s102, 1
        %s233 = smul.addr %s232, 8
        %s234 = scalar_lea.vmem [#allocation5], %s233
        %p235 = pneg %p143
        %p236 = pneg %p140
        %s237 = sand.u32 %s130, 1
        %s238 = scalar_lea.sflag [#allocation7], %s237
        %s239 = sand.u32 %s130, 1
        %s240 = smul.addr %s239, 8
        %s241 = scalar_lea.vmem [#allocation6], %s240
        %s242 = smul.u32 2, %s29
        %s243 = smul.u32 2, %s29
        %p244 = scmp.lt.s32.totalorder %s28, 1
        %s245 = scalar_select %p244, %s28, 1
        %p246 = scmp.lt.s32.totalorder %s243, 1
        %s247 = scalar_select %p246, %s243, 1
        %s248 = smul.addr %s245, 2
        %s249 = sadd.s32 %s247, %s248
        %s250 = scalar_lea.vmem %s1, %s249
        %s251 = smul.u32 2, %s29
        %v252 = vld [vmem:[%s206] sm:$0xff]
        %v253 = vld [vmem:[%s250] sm:$0x3]
        %v254 = vunpack.c.0.s8 %v253
        %v255 = vand.u32 %v254, 255
        %v257 = vcombine.high %v252, %v252
        %vm259 = vcmask 1043456
        %v260 = vsel %vm259, %v252, -inf
        %v261 = vrot.slane %v260, 4
        %v262 = vmax.f32 %v260, %v261
        %v263 = vrot.slane %v262, 2
        %v264 = vmax.f32 %v262, %v263
        %v265 = vrot.slane %v264, 1
        %v266 = vmax.f32 %v264, %v265
        %v267 = vsel %vm259, %v257, -inf
        %v268 = vrot.slane %v267, 4
        %v269 = vmax.f32 %v267, %v268
        %v270 = vrot.slane %v269, 2
        %v271 = vmax.f32 %v269, %v270
        %v272 = vrot.slane %v271, 1
        %v273 = vmax.f32 %v271, %v272
        %v276 = vcombine.low %v266, %v273
        %v278 = vsub.f32 %v252, %v276
        %v279 = vmul.f32 %v278, 1.442695
        %v280 = vpow.pop %v279
        %v282 = vcombine.high %v280, %v280
        %v284 = vsel %vm259, %v280, 0.0
        %v285 = vrot.slane %v284, 4
        %v286 = vadd.f32 %v284, %v285
        %v287 = vrot.slane %v286, 2
        %v288 = vadd.f32 %v286, %v287
        %v289 = vrot.slane %v288, 1
        %v290 = vadd.f32 %v288, %v289
        %v291 = vsel %vm259, %v282, 0.0
        %v292 = vrot.slane %v291, 4
        %v293 = vadd.f32 %v291, %v292
        %v294 = vrot.slane %v293, 2
        %v295 = vadd.f32 %v293, %v294
        %v296 = vrot.slane %v295, 1
        %v297 = vadd.f32 %v295, %v296
        %v298 = vlaneseq
        %v299 = vshrl.u32 %v298, 7
        %v300 = vlaneseq
        %v301 = vshrl.u32 %v300, 7
        %v302 = vsub.s32 0, %v301
        %v303 = vrot.slane %v255, %v302
        %v304 = vlaneseq
        %v305 = vshrl.u32 %v304, 7
        %v306 = vsub.s32 4, %v305
        %v307 = vrot.slane %v255, %v306
        %v308 = vlaneseq
        %v309 = vshrl.u32 %v308, 7
        %v310 = vsub.s32 0, %v309
        %v311 = vrot.slane %v303, %v310
        %v312 = vlaneseq
        %v313 = vshrl.u32 %v312, 7
        %v314 = vsub.s32 0, %v313
        %v315 = vrot.slane %v307, %v314
        %vm316 = vcmp.eq.s32.totalorder %v299, %v311
        %vm317 = vcmp.eq.s32.totalorder %v299, %v315
        %v318 = vsel %vm316, %v252, 0.0
        %v319 = vsel %vm317, %v257, 0.0
        %v320 = vsel %vm259, %v318, 0.0
        %v321 = vrot.slane %v320, 4
        %v322 = vadd.f32 %v320, %v321
        %v323 = vrot.slane %v322, 2
        %v324 = vadd.f32 %v322, %v323
        %v325 = vrot.slane %v324, 1
        %v326 = vadd.f32 %v324, %v325
        %v327 = vsel %vm259, %v319, 0.0
        %v328 = vrot.slane %v327, 4
        %v329 = vadd.f32 %v327, %v328
        %v330 = vrot.slane %v329, 2
        %v331 = vadd.f32 %v329, %v330
        %v332 = vrot.slane %v331, 1
        %v333 = vadd.f32 %v331, %v332
        %v334 = vsub.f32 %v326, %v266
        %v335 = vsub.f32 %v333, %v273
        %v336 = vlog2.pop %v290
        %v337 = vmul.f32 %v336, 0.6931472
        %v338 = vlog2.pop %v297
        %v339 = vmul.f32 %v338, 0.6931472
        %v340 = vsub.f32 %v334, %v337
        %v341 = vsub.f32 %v335, %v339
        %v342 = vmul.f32 %v340, 1.442695
        %v343 = vpow.pop %v342
        %v344 = vmul.f32 %v341, 1.442695
        %v345 = vpow.pop %v344
        %v346 = vsub.f32 1.0, %v343
        %v347 = vsub.f32 1.0, %v345
        %v348 = vmul.f32 %v346, %v346
        %v349 = vmul.f32 %v347, %v347
        %v350 = vmul.f32 %v348, %v340
        %v351 = vmul.f32 %v349, %v341
        %vm352 = vcmp.ne.s32.totalorder %v255, 255
        %v355 = vcombine.low %v350, %v351
        %v357 = vsel %vm352, %v355, 0.0
        %v359 = vlaneseq
        %v360 = vshrl.u32 %v359, 7
        %v361 = vsub.s32 0, %v360
        %v362 = vrot.slane %v357, %v361
        %v363 = vlaneseq
        %v364 = vshrl.u32 %v363, 7
        %v365 = vsub.s32 4, %v364
        %v366 = vrot.slane %v357, %v365
        %vm369 = vcmask 1040384
        %v370 = vsel %vm369, %v362, 0.0
        %v371 = vsel %vm369, %v366, 0.0
        %v372 = vadd.f32 %v370, %v371
        %373 = vadd.xlane.f32.xlu0 %v372
        %v374 = vpop.xlane.xlu0 %373
        %v375 = vrot.slane %v374, 4
        %v376 = vadd.f32 %v374, %v375
        %v377 = vrot.slane %v376, 2
        %v378 = vadd.f32 %v376, %v377
        %v379 = vrot.slane %v378, 1
        %v380 = vadd.f32 %v378, %v379
        %s381 = vtos %v380
        %v382 = vsel %vm352, 1, 0
        %v383 = vcvt.s32.f32 %v382
        %v385 = vlaneseq
        %v386 = vshrl.u32 %v385, 7
        %v387 = vsub.s32 0, %v386
        %v388 = vrot.slane %v383, %v387
        %v389 = vlaneseq
        %v390 = vshrl.u32 %v389, 7
        %v391 = vsub.s32 4, %v390
        %v392 = vrot.slane %v383, %v391
        %v395 = vsel %vm369, %v388, 0.0
        %v396 = vsel %vm369, %v392, 0.0
        %v397 = vadd.f32 %v395, %v396
        %398 = vadd.xlane.f32.xlu0 %v397
        %v399 = vpop.xlane.xlu0 %398
        %v400 = vrot.slane %v399, 4
        %v401 = vadd.f32 %v399, %v400
        %v402 = vrot.slane %v401, 2
        %v403 = vadd.f32 %v401, %v402
        %v404 = vrot.slane %v403, 1
        %v405 = vadd.f32 %v403, %v404
        %s406 = vtos %v405
        %v407 = vstv %s381
        %408 = vst [vmem:[%s234] sm:$0xff] %v407
        %v409 = vstv %s406
        %410 = vst [vmem:[%s241] sm:$0xff] %v409
        %s411 = sand.u32 %s102, 1
        %s412 = scalar_lea.sflag [#allocation4], %s411
        %s413 = sand.u32 %s102, 1
        %s414 = smul.addr %s413, 8
        %s415 = scalar_lea.vmem [#allocation5], %s414
        %s416 = sand.u32 %s130, 1
        %s417 = scalar_lea.sflag [#allocation7], %s416
        %s418 = sand.u32 %s130, 1
        %s419 = smul.addr %s418, 8
        %s420 = scalar_lea.vmem [#allocation6], %s419
        // Predicated region
        $region33: #{tpu_custom_call.1} parent=27 // pred_check
          %p421 = pneg %p112
        $region34: #{tpu_custom_call.1} parent=27 // pred_check_branch
          %423 = sbr.rel (%p421) target = $region36
        $region35: #{tpu_custom_call.1} parent=27 // pred_region
          %s425 = ssub.s32 128, 128
          %426 = vsyncadd %s412, %s425
          %s427 = sadd.s32 %s29, %s28
          %s428 = smul.addr %s427, 128
          %s429 = scalar_lea.hbm %s2, %s428
          %s431 = sshll.u32 %s415, 4
          %s432 = int_to_ptr.vmem [resolvable:$true] %s431
          %434 = dma.vmem_to_hbm [thread:$0]  %s432, 128, %s429, %s412
        $region36: #{tpu_custom_call.1} parent=27 // pred_fallthru
          _
        // Predicated region
        $region37: #{tpu_custom_call.1} parent=27 // pred_check
          %p435 = pneg %p140
        $region38: #{tpu_custom_call.1} parent=27 // pred_check_branch
          %437 = sbr.rel (%p435) target = $region40
        $region39: #{tpu_custom_call.1} parent=27 // pred_region
          %s439 = ssub.s32 128, 128
          %440 = vsyncadd %s417, %s439
          %s441 = sadd.s32 %s29, %s28
          %s442 = smul.addr %s441, 128
          %s443 = scalar_lea.hbm %s3, %s442
          %s445 = sshll.u32 %s420, 4
          %s446 = int_to_ptr.vmem [resolvable:$true] %s445
          %448 = dma.vmem_to_hbm [thread:$0]  %s446, 128, %s443, %s417
        $region40: #{tpu_custom_call.1} parent=27 // pred_fallthru
          _
      $region28: #{tpu_custom_call.1} parent=5 // pred_fallthru
        _
      %p449 = scmp.le.s32.totalorder 2, %s19
      // Predicated region
      $region41: #{tpu_custom_call.1} parent=5 // pred_check
        %p450 = pneg %p449
      $region42: #{tpu_custom_call.1} parent=5 // pred_check_branch
        %452 = sbr.rel (%p450) target = $region44
      $region43: #{tpu_custom_call.1} parent=5 // pred_region
        %s453 = ssub.s32 %s19, 2
        // Predicated region
        $region45: #{tpu_custom_call.1} parent=43 // pred_check
          %p454 = pneg %p118
        $region46: #{tpu_custom_call.1} parent=43 // pred_check_branch
          %456 = sbr.rel (%p454) target = $region48
        $region47: #{tpu_custom_call.1} parent=43 // pred_region
          %s457 = sand.u32 %s103, 1
          %s458 = scalar_lea.sflag [#allocation4], %s457
          %s459 = sand.u32 %s103, 1
          %s460 = smul.addr %s459, 8
          %s461 = scalar_lea.vmem [#allocation5], %s460
          %462 = dma.done %s458, 128
        $region48: #{tpu_custom_call.1} parent=43 // pred_fallthru
          _
        // Predicated region
        $region49: #{tpu_custom_call.1} parent=43 // pred_check
          %p463 = pneg %p146
        $region50: #{tpu_custom_call.1} parent=43 // pred_check_branch
          %465 = sbr.rel (%p463) target = $region52
        $region51: #{tpu_custom_call.1} parent=43 // pred_region
          %s466 = sand.u32 %s131, 1
          %s467 = scalar_lea.sflag [#allocation7], %s466
          %s468 = sand.u32 %s131, 1
          %s469 = smul.addr %s468, 8
          %s470 = scalar_lea.vmem [#allocation6], %s469
          %471 = dma.done %s467, 128
        $region52: #{tpu_custom_call.1} parent=43 // pred_fallthru
          _
      $region44: #{tpu_custom_call.1} parent=5 // pred_fallthru
        _
    $region6: #{tpu_custom_call.1} parent=1 // loop_footer
      %s23 = sadd.s32 1, %s19
    $region7: #{tpu_custom_call.1} parent=1 // loop_footer_branch
      %18 = sbr.rel target = $region3
    $region8: #{tpu_custom_call.1} parent=1 // loop_exit
      _
    %472 = vsyncpa [#allocation3], 1
    %s473 = scalar_lea.sflag [#allocation3], 1
    %474 = vsyncpa %s473, 1
    %475 = vsyncpa [#allocation4], 1
    %s476 = scalar_lea.sflag [#allocation4], 1
    %477 = vsyncpa %s476, 1
    %478 = vsyncpa [#allocation7], 1
    %s479 = scalar_lea.sflag [#allocation7], 1
    %480 = vsyncpa %s479, 1

</llo_original>
